<compile_context>
chip_gen: v7x
topology: tpu7x:2x2x1
jax: 0.10.0
libtpu: 0.0.40
codegen_flags: <defaults>
</compile_context>

<pallas_src>
import jax
import jax.numpy as jnp
from jax.experimental import pallas as pl
from jax.experimental.pallas import tpu as pltpu

INPUT_SIZE = 21 * 3 * 2   # 126
OUTPUT_SIZE = 21 * 3      # 63
HIDDEN = (256, 256, 128, 64)
BN_EPS = 1e-5

PAD_IN = 128              # 126 -> 128
PAD_H4 = 128              # 64  -> 128
PAD_OUT = 128             # 63  -> 128
PADDED_SIZES = (PAD_IN, 256, 256, 128, PAD_H4, PAD_OUT)

MAX_B_TILE = 1024         # per-tile row cap (VMEM stays at a few MiB)
MIN_CORE_TILE = 256       # keep >= 256 rows per grid step once we split (MXU M-fill)


def _round_up(n, m):
    return (n + m - 1) // m * m


def _cdiv(a, b):
    return -(-a // b)


def _pick_tiles(B):
    """Return (b_tile, b_pad).

    b_tile is a multiple of 16 (bf16 sublane pack).  Small batches use a single
    grid step; batches >= 2*MIN_CORE_TILE rows are split into >= 2 steps (so both
    v7x TensorCores get work) with per-step tiles capped at MAX_B_TILE.  Padding
    waste is bounded to <= 15 rows.
    """
    b16 = _round_up(max(B, 1), 16)
    if b16 < 2 * MIN_CORE_TILE:
        return b16, b16
    n_tiles = max(2, _cdiv(b16, MAX_B_TILE))
    b_tile = _round_up(_cdiv(b16, n_tiles), 16)
    return b_tile, n_tiles * b_tile


def _mlp_kernel(x_ref,
                w1_ref, b1_ref,
                w2_ref, b2_ref,
                w3_ref, b3_ref,
                w4_ref, b4_ref,
                w5_ref, b5_ref,
                o_ref):
    """Whole-network forward for one (b_tile, 128) bf16 batch block.

    Weights (bf16) and biases (f32) are VMEM-resident.  All matmuls are bf16 on
    the MXU with f32 accumulation; bias add + ReLU stay in f32 on the VPU.
    """
    h = x_ref[...]                                   # bf16 already

    # fc1 + bn1 (folded) + relu
    h = jnp.dot(h, w1_ref[...], preferred_element_type=jnp.float32) + b1_ref[...]
    h = jnp.maximum(h, 0.0)

    # fc2 + bn2 + relu   (dropout = identity in eval)
    h = jnp.dot(h.astype(jnp.bfloat16), w2_ref[...],
                preferred_element_type=jnp.float32) + b2_ref[...]
    h = jnp.maximum(h, 0.0)

    # fc3 + bn3 + relu
    h = jnp.dot(h.astype(jnp.bfloat16), w3_ref[...],
                preferred_element_type=jnp.float32) + b3_ref[...]
    h = jnp.maximum(h, 0.0)

    # fc4 + bn4 + relu   (padded lanes 64..127: zero weight cols + zero bias -> stay 0)
    h = jnp.dot(h.astype(jnp.bfloat16), w4_ref[...],
                preferred_element_type=jnp.float32) + b4_ref[...]
    h = jnp.maximum(h, 0.0)

    # fc5 (no BN / relu); padded output lanes are 0 and sliced off in the wrapper.
    o_ref[...] = (jnp.dot(h.astype(jnp.bfloat16), w5_ref[...],
                          preferred_element_type=jnp.float32)
                  + b5_ref[...]).astype(o_ref.dtype)


def _fold_bn(w, b, gamma, beta, mean, var, eps=BN_EPS):
    """Fold eval-mode BatchNorm1d into the preceding Linear.

    PyTorch Linear: y = x @ W.T + b  with W of shape (out, in).
    BN(eval):       z = (y - mean) / sqrt(var + eps) * gamma + beta
    Returns W_eff (in, out) and b_eff (1, out) such that z = x @ W_eff + b_eff.
    """
    scale = gamma / jnp.sqrt(var + eps)                       # (out,)
    w_eff = (w * scale[:, None]).T                            # (in, out)
    b_eff = (b - mean) * scale + beta                         # (out,)
    return w_eff.astype(jnp.float32), b_eff.reshape(1, -1).astype(jnp.float32)


def _pad2(a, rows, cols):
    return jnp.pad(a, ((0, rows - a.shape[0]), (0, cols - a.shape[1])))


def init_params(key):
    """Deterministic synthetic parameters matching MLP_v2's shapes."""
    sizes = (INPUT_SIZE,) + HIDDEN + (OUTPUT_SIZE,)
    params = []
    for i in range(5):
        fan_in, fan_out = sizes[i], sizes[i + 1]
        key, kw, kb, kg, kbe, km, kv = jax.random.split(key, 7)
        bound = 1.0 / jnp.sqrt(fan_in)
        w = jax.random.uniform(kw, (fan_out, fan_in), jnp.float32, -bound, bound)
        b = jax.random.uniform(kb, (fan_out,), jnp.float32, -bound, bound)
        layer = {"w": w, "b": b}
        if i < 4:  # layers 1-4 have BatchNorm1d
            layer["gamma"] = 1.0 + 0.1 * jax.random.normal(kg, (fan_out,), jnp.float32)
            layer["beta"] = 0.1 * jax.random.normal(kbe, (fan_out,), jnp.float32)
            layer["mean"] = 0.1 * jax.random.normal(km, (fan_out,), jnp.float32)
            layer["var"] = jnp.abs(1.0 + 0.1 * jax.random.normal(kv, (fan_out,), jnp.float32))
        params.append(layer)
    return params


def prepare_kernel_args(params):
    """Fold BN into Linears, pad all feature dims to 128-lane multiples,
    cast weights to bf16 (biases stay f32). Returns (w1,b1,...,w5,b5)."""
    flat = []
    for i, layer in enumerate(params):
        if i < 4:
            w_eff, b_eff = _fold_bn(layer["w"], layer["b"], layer["gamma"],
                                    layer["beta"], layer["mean"], layer["var"])
        else:
            w_eff = layer["w"].T.astype(jnp.float32)
            b_eff = layer["b"].reshape(1, -1).astype(jnp.float32)
        w_eff = _pad2(w_eff, PADDED_SIZES[i], PADDED_SIZES[i + 1]).astype(jnp.bfloat16)
        b_eff = _pad2(b_eff, 1, PADDED_SIZES[i + 1]).astype(jnp.float32)
        flat += [w_eff, b_eff]
    return tuple(flat)


@jax.jit
def mlp_v2_forward(x, flat_args):
    """x: (B, 126) float32 -> (B, 63) float32."""
    B, F = x.shape
    b_tile, b_pad = _pick_tiles(B)

    # Pad + cast to bf16 in one wrapper copy (halves input HBM bytes vs f32).
    x_p = jnp.pad(x.astype(jnp.bfloat16), ((0, b_pad - B), (0, PAD_IN - F)))

    def _batch_spec(last_dim):
        return pl.BlockSpec((b_tile, last_dim), lambda i: (i, 0))

    def _resident_spec(arr):
        # Weights/biases: constant block index -> DMA'd once, stay VMEM-resident
        # across the whole grid.  (Per-arg helper avoids the late-binding lambda
        # closure bug; double-buffer overhead on these is ~0.35 MiB total, ignorable.)
        return pl.BlockSpec(arr.shape, lambda i: (0, 0))

    in_specs = [_batch_spec(PAD_IN)] + [_resident_spec(a) for a in flat_args]

    out_p = pl.pallas_call(
        _mlp_kernel,
        out_shape=jax.ShapeDtypeStruct((b_pad, PAD_OUT), jnp.bfloat16),
        grid=(b_pad // b_tile,),
        in_specs=in_specs,
        out_specs=_batch_spec(PAD_OUT),
        compiler_params=pltpu.CompilerParams(
            dimension_semantics=("parallel",)),
    )(x_p, *flat_args)

    # Slice off batch/lane padding; upcast to f32 in the same copy.
    return out_p[:B, :OUTPUT_SIZE].astype(jnp.float32)


def reference_forward(x, params):
    """Pure-JAX f32 reference (eval-mode PyTorch semantics)."""
    h = x
    for i, layer in enumerate(params):
        h = h @ layer["w"].T + layer["b"]
        if i < 4:
            h = (h - layer["mean"]) / jnp.sqrt(layer["var"] + BN_EPS) \
                * layer["gamma"] + layer["beta"]
            h = jnp.maximum(h, 0.0)
    return h


if __name__ == "__main__":
    key = jax.random.PRNGKey(0)
    kp, kx = jax.random.split(key)

    params = init_params(kp)
    flat_args = prepare_kernel_args(params)

    B = 8
    x = jax.random.normal(kx, (B, INPUT_SIZE), jnp.float32)

    out = jax.block_until_ready(mlp_v2_forward(x, flat_args))
    ref = reference_forward(x, params)

    assert out.shape == (B, OUTPUT_SIZE)
    max_err = jnp.max(jnp.abs(out - ref))
    # bf16 weights/activations/IO vs f32 reference -> loosened tolerance.
    assert jnp.allclose(out, ref, atol=5e-2, rtol=5e-2), f"max abs err = {max_err}"

    print("KERNEL_OK")
</pallas_src>

<mosaic_0001>
module attributes {stable_mosaic.version = 11 : i64} {
  func.func @_mlp_kernel(%arg0: i32, %arg1: memref<16x128xbf16, #tpu.memory_space<vmem>>, %arg2: memref<128x256xbf16, #tpu.memory_space<vmem>>, %arg3: memref<1x256xf32, #tpu.memory_space<vmem>>, %arg4: memref<256x256xbf16, #tpu.memory_space<vmem>>, %arg5: memref<1x256xf32, #tpu.memory_space<vmem>>, %arg6: memref<256x128xbf16, #tpu.memory_space<vmem>>, %arg7: memref<1x128xf32, #tpu.memory_space<vmem>>, %arg8: memref<128x128xbf16, #tpu.memory_space<vmem>>, %arg9: memref<1x128xf32, #tpu.memory_space<vmem>>, %arg10: memref<128x128xbf16, #tpu.memory_space<vmem>>, %arg11: memref<1x128xf32, #tpu.memory_space<vmem>>, %arg12: memref<16x128xbf16, #tpu.memory_space<vmem>>) attributes {dimension_semantics = [#tpu.dimension_semantics<parallel>], iteration_bounds = array<i64: 1>, scalar_prefetch = 0 : i64, scratch_operands = 0 : i64, tpu.core_type = #tpu.core_type<tc>, window_params = [{transform_indices = @transform_0, window_bounds = array<i64: 16, 128>}, {pipeline_mode = #tpu.pipeline_mode<synchronous>, transform_indices = @transform_1, window_bounds = array<i64: 128, 256>}, {pipeline_mode = #tpu.pipeline_mode<synchronous>, transform_indices = @transform_2, window_bounds = array<i64: 1, 256>}, {pipeline_mode = #tpu.pipeline_mode<synchronous>, transform_indices = @transform_3, window_bounds = array<i64: 256, 256>}, {pipeline_mode = #tpu.pipeline_mode<synchronous>, transform_indices = @transform_4, window_bounds = array<i64: 1, 256>}, {pipeline_mode = #tpu.pipeline_mode<synchronous>, transform_indices = @transform_5, window_bounds = array<i64: 256, 128>}, {pipeline_mode = #tpu.pipeline_mode<synchronous>, transform_indices = @transform_6, window_bounds = array<i64: 1, 128>}, {pipeline_mode = #tpu.pipeline_mode<synchronous>, transform_indices = @transform_7, window_bounds = array<i64: 128, 128>}, {pipeline_mode = #tpu.pipeline_mode<synchronous>, transform_indices = @transform_8, window_bounds = array<i64: 1, 128>}, {pipeline_mode = #tpu.pipeline_mode<synchronous>, transform_indices = @transform_9, window_bounds = array<i64: 128, 128>}, {pipeline_mode = #tpu.pipeline_mode<synchronous>, transform_indices = @transform_10, window_bounds = array<i64: 1, 128>}, {transform_indices = @transform_11, window_bounds = array<i64: 16, 128>}]} {
    %c0 = arith.constant 0 : index
    %c0_0 = arith.constant 0 : index
    %0 = vector.load %arg1[%c0, %c0_0] : memref<16x128xbf16, #tpu.memory_space<vmem>>, vector<16x128xbf16>
    %c0_1 = arith.constant 0 : index
    %c0_2 = arith.constant 0 : index
    %1 = vector.load %arg2[%c0_1, %c0_2] : memref<128x256xbf16, #tpu.memory_space<vmem>>, vector<128x256xbf16>
    %cst = arith.constant dense<0.000000e+00> : vector<16x256xf32>
    %2 = tpu.matmul %0, %1, %cst {dimension_numbers = #tpu.dot_dimension_numbers<[1], [0], [0], [1], [0, 0, 1, 1], [], []>} : vector<16x128xbf16>, vector<128x256xbf16>, vector<16x256xf32> -> vector<16x256xf32>
    %c0_3 = arith.constant 0 : index
    %c0_4 = arith.constant 0 : index
    %3 = vector.load %arg3[%c0_3, %c0_4] : memref<1x256xf32, #tpu.memory_space<vmem>>, vector<1x256xf32>
    %4 = vector.broadcast %3 : vector<1x256xf32> to vector<16x256xf32>
    %5 = arith.addf %2, %4 : vector<16x256xf32>
    %cst_5 = arith.constant 0.000000e+00 : f32
    %6 = vector.broadcast %cst_5 : f32 to vector<16x256xf32>
    %7 = arith.maximumf %5, %6 : vector<16x256xf32>
    %8 = arith.truncf %7 : vector<16x256xf32> to vector<16x256xbf16>
    %c0_6 = arith.constant 0 : index
    %c0_7 = arith.constant 0 : index
    %9 = vector.load %arg4[%c0_6, %c0_7] : memref<256x256xbf16, #tpu.memory_space<vmem>>, vector<256x256xbf16>
    %cst_8 = arith.constant dense<0.000000e+00> : vector<16x256xf32>
    %10 = tpu.matmul %8, %9, %cst_8 {dimension_numbers = #tpu.dot_dimension_numbers<[1], [0], [0], [1], [0, 0, 1, 1], [], []>} : vector<16x256xbf16>, vector<256x256xbf16>, vector<16x256xf32> -> vector<16x256xf32>
    %c0_9 = arith.constant 0 : index
    %c0_10 = arith.constant 0 : index
    %11 = vector.load %arg5[%c0_9, %c0_10] : memref<1x256xf32, #tpu.memory_space<vmem>>, vector<1x256xf32>
    %12 = vector.broadcast %11 : vector<1x256xf32> to vector<16x256xf32>
    %13 = arith.addf %10, %12 : vector<16x256xf32>
    %cst_11 = arith.constant 0.000000e+00 : f32
    %14 = vector.broadcast %cst_11 : f32 to vector<16x256xf32>
    %15 = arith.maximumf %13, %14 : vector<16x256xf32>
    %16 = arith.truncf %15 : vector<16x256xf32> to vector<16x256xbf16>
    %c0_12 = arith.constant 0 : index
    %c0_13 = arith.constant 0 : index
    %17 = vector.load %arg6[%c0_12, %c0_13] : memref<256x128xbf16, #tpu.memory_space<vmem>>, vector<256x128xbf16>
    %cst_14 = arith.constant dense<0.000000e+00> : vector<16x128xf32>
    %18 = tpu.matmul %16, %17, %cst_14 {dimension_numbers = #tpu.dot_dimension_numbers<[1], [0], [0], [1], [0, 0, 1, 1], [], []>} : vector<16x256xbf16>, vector<256x128xbf16>, vector<16x128xf32> -> vector<16x128xf32>
    %c0_15 = arith.constant 0 : index
    %c0_16 = arith.constant 0 : index
    %19 = vector.load %arg7[%c0_15, %c0_16] : memref<1x128xf32, #tpu.memory_space<vmem>>, vector<1x128xf32>
    %20 = vector.broadcast %19 : vector<1x128xf32> to vector<16x128xf32>
    %21 = arith.addf %18, %20 : vector<16x128xf32>
    %cst_17 = arith.constant 0.000000e+00 : f32
    %22 = vector.broadcast %cst_17 : f32 to vector<16x128xf32>
    %23 = arith.maximumf %21, %22 : vector<16x128xf32>
    %24 = arith.truncf %23 : vector<16x128xf32> to vector<16x128xbf16>
    %c0_18 = arith.constant 0 : index
    %c0_19 = arith.constant 0 : index
    %25 = vector.load %arg8[%c0_18, %c0_19] : memref<128x128xbf16, #tpu.memory_space<vmem>>, vector<128x128xbf16>
    %cst_20 = arith.constant dense<0.000000e+00> : vector<16x128xf32>
    %26 = tpu.matmul %24, %25, %cst_20 {dimension_numbers = #tpu.dot_dimension_numbers<[1], [0], [0], [1], [0, 0, 1, 1], [], []>} : vector<16x128xbf16>, vector<128x128xbf16>, vector<16x128xf32> -> vector<16x128xf32>
    %c0_21 = arith.constant 0 : index
    %c0_22 = arith.constant 0 : index
    %27 = vector.load %arg9[%c0_21, %c0_22] : memref<1x128xf32, #tpu.memory_space<vmem>>, vector<1x128xf32>
    %28 = vector.broadcast %27 : vector<1x128xf32> to vector<16x128xf32>
    %29 = arith.addf %26, %28 : vector<16x128xf32>
    %cst_23 = arith.constant 0.000000e+00 : f32
    %30 = vector.broadcast %cst_23 : f32 to vector<16x128xf32>
    %31 = arith.maximumf %29, %30 : vector<16x128xf32>
    %32 = arith.truncf %31 : vector<16x128xf32> to vector<16x128xbf16>
    %c0_24 = arith.constant 0 : index
    %c0_25 = arith.constant 0 : index
    %33 = vector.load %arg10[%c0_24, %c0_25] : memref<128x128xbf16, #tpu.memory_space<vmem>>, vector<128x128xbf16>
    %cst_26 = arith.constant dense<0.000000e+00> : vector<16x128xf32>
    %34 = tpu.matmul %32, %33, %cst_26 {dimension_numbers = #tpu.dot_dimension_numbers<[1], [0], [0], [1], [0, 0, 1, 1], [], []>} : vector<16x128xbf16>, vector<128x128xbf16>, vector<16x128xf32> -> vector<16x128xf32>
    %c0_27 = arith.constant 0 : index
    %c0_28 = arith.constant 0 : index
    %35 = vector.load %arg11[%c0_27, %c0_28] : memref<1x128xf32, #tpu.memory_space<vmem>>, vector<1x128xf32>
    %36 = vector.broadcast %35 : vector<1x128xf32> to vector<16x128xf32>
    %37 = arith.addf %34, %36 : vector<16x128xf32>
    %38 = arith.truncf %37 : vector<16x128xf32> to vector<16x128xbf16>
    %c0_29 = arith.constant 0 : index
    %c0_30 = arith.constant 0 : index
    %39 = vector.load %arg12[%c0_29, %c0_30] : memref<16x128xbf16, #tpu.memory_space<vmem>>, vector<16x128xbf16>
    tpu.vector_store %arg12[%c0_29, %c0_30], %38 {strides = array<i32>} : memref<16x128xbf16, #tpu.memory_space<vmem>>, vector<16x128xbf16>,
    return
  }
  func.func @transform_0(%arg0: i32) -> (i32, i32) {
    %c0_i32 = arith.constant 0 : i32
    %c0_i32_0 = arith.constant 0 : i32
    return %arg0, %c0_i32 : i32, i32
  }
  func.func @transform_1(%arg0: i32) -> (i32, i32) {
    %c0_i32 = arith.constant 0 : i32
    %c0_i32_0 = arith.constant 0 : i32
    %c0_i32_1 = arith.constant 0 : i32
    return %c0_i32, %c0_i32_0 : i32, i32
  }
  func.func @transform_2(%arg0: i32) -> (i32, i32) {
    %c0_i32 = arith.constant 0 : i32
    %c0_i32_0 = arith.constant 0 : i32
    %c0_i32_1 = arith.constant 0 : i32
    return %c0_i32, %c0_i32_0 : i32, i32
  }
  func.func @transform_3(%arg0: i32) -> (i32, i32) {
    %c0_i32 = arith.constant 0 : i32
    %c0_i32_0 = arith.constant 0 : i32
    %c0_i32_1 = arith.constant 0 : i32
    return %c0_i32, %c0_i32_0 : i32, i32
  }
  func.func @transform_4(%arg0: i32) -> (i32, i32) {
    %c0_i32 = arith.constant 0 : i32
    %c0_i32_0 = arith.constant 0 : i32
    %c0_i32_1 = arith.constant 0 : i32
    return %c0_i32, %c0_i32_0 : i32, i32
  }
  func.func @transform_5(%arg0: i32) -> (i32, i32) {
    %c0_i32 = arith.constant 0 : i32
    %c0_i32_0 = arith.constant 0 : i32
    %c0_i32_1 = arith.constant 0 : i32
    return %c0_i32, %c0_i32_0 : i32, i32
  }
  func.func @transform_6(%arg0: i32) -> (i32, i32) {
    %c0_i32 = arith.constant 0 : i32
    %c0_i32_0 = arith.constant 0 : i32
    %c0_i32_1 = arith.constant 0 : i32
    return %c0_i32, %c0_i32_0 : i32, i32
  }
  func.func @transform_7(%arg0: i32) -> (i32, i32) {
    %c0_i32 = arith.constant 0 : i32
    %c0_i32_0 = arith.constant 0 : i32
    %c0_i32_1 = arith.constant 0 : i32
    return %c0_i32, %c0_i32_0 : i32, i32
  }
  func.func @transform_8(%arg0: i32) -> (i32, i32) {
    %c0_i32 = arith.constant 0 : i32
    %c0_i32_0 = arith.constant 0 : i32
    %c0_i32_1 = arith.constant 0 : i32
    return %c0_i32, %c0_i32_0 : i32, i32
  }
  func.func @transform_9(%arg0: i32) -> (i32, i32) {
    %c0_i32 = arith.constant 0 : i32
    %c0_i32_0 = arith.constant 0 : i32
    %c0_i32_1 = arith.constant 0 : i32
    return %c0_i32, %c0_i32_0 : i32, i32
  }
  func.func @transform_10(%arg0: i32) -> (i32, i32) {
    %c0_i32 = arith.constant 0 : i32
    %c0_i32_0 = arith.constant 0 : i32
    %c0_i32_1 = arith.constant 0 : i32
    return %c0_i32, %c0_i32_0 : i32, i32
  }
  func.func @transform_11(%arg0: i32) -> (i32, i32) {
    %c0_i32 = arith.constant 0 : i32
    %c0_i32_0 = arith.constant 0 : i32
    return %arg0, %c0_i32 : i32, i32
  }
}

</mosaic_0001>

<llo_original>
// kernel: mlp_v2_forward.1
$region0: #{mlp_v2_forward.1}
  #allocation0 [shape = 'u32[]', space=smem, size = 0x4, offset = 0x4, fixed_abs, tag = 'smem constant byte address 0x4 - core index']
  #allocation1 [shape = 'u32[144,128]{1,0:T(1,128)}', space=vmem, size = 0x12000, scoped, tag = 'internal scratch']
  %s0 = inlined_call_operand.vmem [shape: bf16[16,128], index: 0, kind: input, shape index: {}]
  %s1 = inlined_call_operand.hbm [shape: bf16[128,256], index: 1, kind: input, shape index: {}]
  %s2 = inlined_call_operand.vmem [shape: f32[1,256], index: 2, kind: input, shape index: {}]
  %s3 = inlined_call_operand.hbm [shape: bf16[256,256], index: 3, kind: input, shape index: {}]
  %s4 = inlined_call_operand.vmem [shape: f32[1,256], index: 4, kind: input, shape index: {}]
  %s5 = inlined_call_operand.hbm [shape: bf16[256,128], index: 5, kind: input, shape index: {}]
  %s6 = inlined_call_operand.vmem [shape: f32[1,128], index: 6, kind: input, shape index: {}]
  %s7 = inlined_call_operand.hbm [shape: bf16[128,128], index: 7, kind: input, shape index: {}]
  %s8 = inlined_call_operand.vmem [shape: f32[1,128], index: 8, kind: input, shape index: {}]
  %s9 = inlined_call_operand.hbm [shape: bf16[128,128], index: 9, kind: input, shape index: {}]
  %s10 = inlined_call_operand.vmem [shape: f32[1,128], index: 10, kind: input, shape index: {}]
  %s11 = inlined_call_operand.vmem [shape: bf16[16,128], index: 11, kind: output, shape index: {}]
  %s12 = sld [smem:[#allocation0]]
  $region74: #{mlp_v2_forward.1} parent=0
    _
  %s14 = ssub.s32 1, %s12
  %s15 = scalar_select 0, %s14, %s12
  $region1: #{mlp_v2_forward.1} parent=0
    #allocation2 [shape = 'u8[65536]{0}', space=vmem, size = 0x10000, scoped, tag = 'input window, operand 1, single buffered']
    #allocation3 [shape = 's32[1]{0}', space=sflag, size = 0x4, scoped, tag = 'scoped memory for mlp_v2_forward.1']
    #allocation4 [shape = 'u8[131072]{0}', space=vmem, size = 0x20000, scoped, tag = 'input window, operand 3, single buffered']
    #allocation5 [shape = 's32[1]{0}', space=sflag, size = 0x4, scoped, tag = 'scoped memory for mlp_v2_forward.1']
    #allocation6 [shape = 'u8[65536]{0}', space=vmem, size = 0x10000, scoped, tag = 'input window, operand 5, single buffered']
    #allocation7 [shape = 'u8[32768]{0}', space=vmem, size = 0x8000, scoped, tag = 'input window, operand 7, single buffered']
    #allocation8 [shape = 's32[1]{0}', space=sflag, size = 0x4, scoped, tag = 'scoped memory for mlp_v2_forward.1']
    #allocation9 [shape = 'u8[32768]{0}', space=vmem, size = 0x8000, scoped, tag = 'input window, operand 9, single buffered']
    %16 = vsyncpa [#allocation3], 0
    %17 = vsyncpa [#allocation5], 0
    %18 = vsyncpa [#allocation8], 0
    // Predicated region
    $region2: #{mlp_v2_forward.1} parent=1 // pred_check
      _
    $region3: #{mlp_v2_forward.1} parent=1 // pred_check_branch
      %20 = sbr.rel (0) target = $region5
    $region4: #{mlp_v2_forward.1} parent=1 // pred_region
      _
    $region5: #{mlp_v2_forward.1} parent=1 // pred_fallthru
      _
    // Predicated region
    $region6: #{mlp_v2_forward.1} parent=1 // pred_check
      _
    $region7: #{mlp_v2_forward.1} parent=1 // pred_check_branch
      %22 = sbr.rel (0) target = $region9
    $region8: #{mlp_v2_forward.1} parent=1 // pred_region
      %s24 = ssub.s32 2048, 2048
      %25 = vsyncadd [#allocation3], %s24
      %s26 = sshll.u32 [#allocation2], 4
      %s27 = int_to_ptr.vmem [resolvable:$true] %s26
      %32 = dma.hbm_to_vmem [thread:$0]  %s1, 2048, %s27, [#allocation3], 128, 128, 8
    $region9: #{mlp_v2_forward.1} parent=1 // pred_fallthru
      _
    // Predicated region
    $region10: #{mlp_v2_forward.1} parent=1 // pred_check
      _
    $region11: #{mlp_v2_forward.1} parent=1 // pred_check_branch
      %34 = sbr.rel (0) target = $region13
    $region12: #{mlp_v2_forward.1} parent=1 // pred_region
      _
    $region13: #{mlp_v2_forward.1} parent=1 // pred_fallthru
      _
    // Predicated region
    $region14: #{mlp_v2_forward.1} parent=1 // pred_check
      _
    $region15: #{mlp_v2_forward.1} parent=1 // pred_check_branch
      %36 = sbr.rel (0) target = $region17
    $region16: #{mlp_v2_forward.1} parent=1 // pred_region
      %s38 = ssub.s32 4096, 4096
      %39 = vsyncadd [#allocation5], %s38
      %s40 = sshll.u32 [#allocation4], 4
      %s41 = int_to_ptr.vmem [resolvable:$true] %s40
      %46 = dma.hbm_to_vmem [thread:$0]  %s3, 4096, %s41, [#allocation5], 128, 128, 8
    $region17: #{mlp_v2_forward.1} parent=1 // pred_fallthru
      _
    // Predicated region
    $region18: #{mlp_v2_forward.1} parent=1 // pred_check
      _
    $region19: #{mlp_v2_forward.1} parent=1 // pred_check_branch
      %48 = sbr.rel (0) target = $region21
    $region20: #{mlp_v2_forward.1} parent=1 // pred_region
      _
    $region21: #{mlp_v2_forward.1} parent=1 // pred_fallthru
      _
    // Predicated region
    $region22: #{mlp_v2_forward.1} parent=1 // pred_check
      _
    $region23: #{mlp_v2_forward.1} parent=1 // pred_check_branch
      %50 = sbr.rel (0) target = $region25
    $region24: #{mlp_v2_forward.1} parent=1 // pred_region
      %s52 = ssub.s32 2048, 2048
      %53 = vsyncadd [#allocation5], %s52
      %s54 = sshll.u32 [#allocation6], 4
      %s55 = int_to_ptr.vmem [resolvable:$true] %s54
      %60 = dma.hbm_to_vmem [thread:$0]  %s5, 2048, %s55, [#allocation5], 64, 64, 4
    $region25: #{mlp_v2_forward.1} parent=1 // pred_fallthru
      _
    // Predicated region
    $region26: #{mlp_v2_forward.1} parent=1 // pred_check
      _
    $region27: #{mlp_v2_forward.1} parent=1 // pred_check_branch
      %62 = sbr.rel (0) target = $region29
    $region28: #{mlp_v2_forward.1} parent=1 // pred_region
      _
    $region29: #{mlp_v2_forward.1} parent=1 // pred_fallthru
      _
    // Predicated region
    $region30: #{mlp_v2_forward.1} parent=1 // pred_check
      _
    $region31: #{mlp_v2_forward.1} parent=1 // pred_check_branch
      %64 = sbr.rel (0) target = $region33
    $region32: #{mlp_v2_forward.1} parent=1 // pred_region
      %s66 = ssub.s32 1024, 1024
      %67 = vsyncadd [#allocation8], %s66
      %s68 = sshll.u32 [#allocation7], 4
      %s69 = int_to_ptr.vmem [resolvable:$true] %s68
      %74 = dma.hbm_to_vmem [thread:$0]  %s7, 1024, %s69, [#allocation8], 64, 64, 4
    $region33: #{mlp_v2_forward.1} parent=1 // pred_fallthru
      _
    // Predicated region
    $region34: #{mlp_v2_forward.1} parent=1 // pred_check
      _
    $region35: #{mlp_v2_forward.1} parent=1 // pred_check_branch
      %76 = sbr.rel (0) target = $region37
    $region36: #{mlp_v2_forward.1} parent=1 // pred_region
      _
    $region37: #{mlp_v2_forward.1} parent=1 // pred_fallthru
      _
    // Predicated region
    $region38: #{mlp_v2_forward.1} parent=1 // pred_check
      _
    $region39: #{mlp_v2_forward.1} parent=1 // pred_check_branch
      %78 = sbr.rel (0) target = $region41
    $region40: #{mlp_v2_forward.1} parent=1 // pred_region
      %s80 = ssub.s32 1024, 1024
      %81 = vsyncadd [#allocation8], %s80
      %s82 = sshll.u32 [#allocation9], 4
      %s83 = int_to_ptr.vmem [resolvable:$true] %s82
      %88 = dma.hbm_to_vmem [thread:$0]  %s9, 1024, %s83, [#allocation8], 64, 64, 4
    $region41: #{mlp_v2_forward.1} parent=1 // pred_fallthru
      _
    // Predicated region
    $region42: #{mlp_v2_forward.1} parent=1 // pred_check
      _
    $region43: #{mlp_v2_forward.1} parent=1 // pred_check_branch
      %90 = sbr.rel (0) target = $region45
    $region44: #{mlp_v2_forward.1} parent=1 // pred_region
      _
    $region45: #{mlp_v2_forward.1} parent=1 // pred_fallthru
      _
    // Predicated region
    $region46: #{mlp_v2_forward.1} parent=1 // pred_check
      _
    $region47: #{mlp_v2_forward.1} parent=1 // pred_check_branch
      %92 = sbr.rel (0) target = $region49
    $region48: #{mlp_v2_forward.1} parent=1 // pred_region
      %93 = dma.done [#allocation3], 2048
    $region49: #{mlp_v2_forward.1} parent=1 // pred_fallthru
      _
    // Predicated region
    $region50: #{mlp_v2_forward.1} parent=1 // pred_check
      _
    $region51: #{mlp_v2_forward.1} parent=1 // pred_check_branch
      %95 = sbr.rel (0) target = $region53
    $region52: #{mlp_v2_forward.1} parent=1 // pred_region
      %96 = dma.done [#allocation5], 4096
    $region53: #{mlp_v2_forward.1} parent=1 // pred_fallthru
      _
    // Predicated region
    $region54: #{mlp_v2_forward.1} parent=1 // pred_check
      _
    $region55: #{mlp_v2_forward.1} parent=1 // pred_check_branch
      %98 = sbr.rel (0) target = $region57
    $region56: #{mlp_v2_forward.1} parent=1 // pred_region
      %99 = dma.done [#allocation5], 2048
    $region57: #{mlp_v2_forward.1} parent=1 // pred_fallthru
      _
    // Predicated region
    $region58: #{mlp_v2_forward.1} parent=1 // pred_check
      _
    $region59: #{mlp_v2_forward.1} parent=1 // pred_check_branch
      %101 = sbr.rel (0) target = $region61
    $region60: #{mlp_v2_forward.1} parent=1 // pred_region
      %102 = dma.done [#allocation8], 1024
    $region61: #{mlp_v2_forward.1} parent=1 // pred_fallthru
      _
    // Predicated region
    $region62: #{mlp_v2_forward.1} parent=1 // pred_check
      _
    $region63: #{mlp_v2_forward.1} parent=1 // pred_check_branch
      %104 = sbr.rel (0) target = $region65
    $region64: #{mlp_v2_forward.1} parent=1 // pred_region
      %105 = dma.done [#allocation8], 1024
    $region65: #{mlp_v2_forward.1} parent=1 // pred_fallthru
      _
    %v107 = vld [vmem:[%s0] sm:$0xf]
    %v108 = vld [vmem:[%s0 + $0x4] sm:$0xf]
    %v109 = vld [vmem:[#allocation2] sm:$0xff]
    %v110 = vld [vmem:[#allocation2 + $0x8] sm:$0xff]
    %v111 = vld [vmem:[#allocation2 + $0x10] sm:$0xff]
    %v112 = vld [vmem:[#allocation2 + $0x18] sm:$0xff]
    %v113 = vld [vmem:[#allocation2 + $0x20] sm:$0xff]
    %v114 = vld [vmem:[#allocation2 + $0x28] sm:$0xff]
    %v115 = vld [vmem:[#allocation2 + $0x30] sm:$0xff]
    %v116 = vld [vmem:[#allocation2 + $0x38] sm:$0xff]
    %v117 = vld [vmem:[#allocation2 + $0x40] sm:$0xff]
    %v118 = vld [vmem:[#allocation2 + $0x48] sm:$0xff]
    %v119 = vld [vmem:[#allocation2 + $0x50] sm:$0xff]
    %v120 = vld [vmem:[#allocation2 + $0x58] sm:$0xff]
    %v121 = vld [vmem:[#allocation2 + $0x60] sm:$0xff]
    %v122 = vld [vmem:[#allocation2 + $0x68] sm:$0xff]
    %v123 = vld [vmem:[#allocation2 + $0x70] sm:$0xff]
    %v124 = vld [vmem:[#allocation2 + $0x78] sm:$0xff]
    %v125 = vld [vmem:[%s2] sm:$0x3]
    %v127 = vlaneseq
    %v128 = vshrl.u32 %v127, 7
    %v129 = vsub.s32 0, %v128
    %v130 = vrot.slane %v125, %v129
    %v131 = vlaneseq
    %v132 = vshrl.u32 %v131, 7
    %v133 = vsub.s32 1, %v132
    %v134 = vrot.slane %v125, %v133
    %v139 = vunpack.c.l.b16 %v107
    %v140 = vunpack.c.l.b16 %v108
    %v141 = vpack.c.b16 %v140, %v139
    %v159 = vunpack.c.l.b16 %v109
    %v160 = vunpack.c.h.b16 %v109
    %v161 = vunpack.c.l.b16 %v110
    %v162 = vunpack.c.h.b16 %v110
    %v163 = vunpack.c.l.b16 %v111
    %v164 = vunpack.c.h.b16 %v111
    %v165 = vunpack.c.l.b16 %v112
    %v166 = vunpack.c.h.b16 %v112
    %v167 = vunpack.c.l.b16 %v113
    %v168 = vunpack.c.h.b16 %v113
    %v169 = vunpack.c.l.b16 %v114
    %v170 = vunpack.c.h.b16 %v114
    %v171 = vunpack.c.l.b16 %v115
    %v172 = vunpack.c.h.b16 %v115
    %v173 = vunpack.c.l.b16 %v116
    %v174 = vunpack.c.h.b16 %v116
    %v175 = vunpack.c.l.b16 %v117
    %v176 = vunpack.c.h.b16 %v117
    %v177 = vunpack.c.l.b16 %v118
    %v178 = vunpack.c.h.b16 %v118
    %v179 = vunpack.c.l.b16 %v119
    %v180 = vunpack.c.h.b16 %v119
    %v181 = vunpack.c.l.b16 %v120
    %v182 = vunpack.c.h.b16 %v120
    %v183 = vunpack.c.l.b16 %v121
    %v184 = vunpack.c.h.b16 %v121
    %v185 = vunpack.c.l.b16 %v122
    %v186 = vunpack.c.h.b16 %v122
    %v187 = vunpack.c.l.b16 %v123
    %v188 = vunpack.c.h.b16 %v123
    %v189 = vunpack.c.l.b16 %v124
    %v190 = vunpack.c.h.b16 %v124
    %v191 = vpack.c.b16 %v161, %v159
    %v192 = vpack.c.b16 %v162, %v160
    %v193 = vpack.c.b16 %v165, %v163
    %v194 = vpack.c.b16 %v166, %v164
    %v195 = vpack.c.b16 %v169, %v167
    %v196 = vpack.c.b16 %v170, %v168
    %v197 = vpack.c.b16 %v173, %v171
    %v198 = vpack.c.b16 %v174, %v172
    %v199 = vpack.c.b16 %v177, %v175
    %v200 = vpack.c.b16 %v178, %v176
    %v201 = vpack.c.b16 %v181, %v179
    %v202 = vpack.c.b16 %v182, %v180
    %v203 = vpack.c.b16 %v185, %v183
    %v204 = vpack.c.b16 %v186, %v184
    %v205 = vpack.c.b16 %v189, %v187
    %v206 = vpack.c.b16 %v190, %v188
    %223 = vmatprep.subr.bf16.mxu0 %v192
    %224 = vmatpush1.bf16.msra.mxu0 %v191
    %225 = vmatprep.subr.bf16.mxu0 %v194
    %226 = vmatpush1.bf16.msra.mxu0 %v193
    %227 = vmatprep.subr.bf16.mxu0 %v196
    %228 = vmatpush1.bf16.msra.mxu0 %v195
    %229 = vmatprep.subr.bf16.mxu0 %v198
    %230 = vmatpush1.bf16.msra.mxu0 %v197
    %231 = vmatprep.subr.bf16.mxu0 %v200
    %232 = vmatpush1.bf16.msra.mxu0 %v199
    %233 = vmatprep.subr.bf16.mxu0 %v202
    %234 = vmatpush1.bf16.msra.mxu0 %v201
    %235 = vmatprep.subr.bf16.mxu0 %v204
    %236 = vmatpush1.bf16.msra.mxu0 %v203
    %237 = vmatprep.subr.bf16.mxu0 %v206
    %238 = vmatpush1.bf16.msra.mxu0 %v205
    %239 = vmatprep.subr.bf16.mxu0 0
    %240 = vmatpush1.bf16.msra.mxu0 0
    %241 = vmatprep.subr.bf16.mxu0 0
    %242 = vmatpush1.bf16.msra.mxu0 0
    %243 = vmatprep.subr.bf16.mxu0 0
    %244 = vmatpush1.bf16.msra.mxu0 0
    %245 = vmatprep.subr.bf16.mxu0 0
    %246 = vmatpush1.bf16.msra.mxu0 0
    %247 = vmatprep.subr.bf16.mxu0 0
    %248 = vmatpush1.bf16.msra.mxu0 0
    %249 = vmatprep.subr.bf16.mxu0 0
    %250 = vmatpush1.bf16.msra.mxu0 0
    %251 = vmatprep.subr.bf16.mxu0 0
    %252 = vmatpush1.bf16.msra.mxu0 0
    %253 = vmatprep.subr.bf16.mxu0 0
    %254 = vmatpush1.bf16.msra.mxu0 0
    %255 = vmatprep.mubr.bf16.mxu0 0
    %256 = vmatmul.mubr.bf16.gmra.mrb[0].mxu0 %v141
    %v257 = vpop.f32.mrb[0].mxu0
    %v258 = vadd.f32 %v130, %v257
    %v259 = vpop.f32.mrb[0].mxu0
    %v260 = vadd.f32 %v134, %v259
    %v261 = vpop.f32.mrb[0].mxu0
    %v262 = vadd.f32 %v130, %v261
    %v263 = vpop.f32.mrb[0].mxu0
    %v264 = vadd.f32 %v134, %v263
    %265 = vdwg.mxu0
    %v266 = vmax.f32 %v258, 0.0
    %v267 = vmax.f32 %v260, 0.0
    %v268 = vmax.f32 %v262, 0.0
    %v269 = vmax.f32 %v264, 0.0
    %v270 = vpack.c.bf16 %v268, %v266
    %v271 = vpack.c.bf16 %v269, %v267
    %v272 = vld [vmem:[#allocation4] sm:$0xff]
    %v273 = vld [vmem:[#allocation4 + $0x8] sm:$0xff]
    %v274 = vld [vmem:[#allocation4 + $0x10] sm:$0xff]
    %v275 = vld [vmem:[#allocation4 + $0x18] sm:$0xff]
    %v276 = vld [vmem:[#allocation4 + $0x20] sm:$0xff]
    %v277 = vld [vmem:[#allocation4 + $0x28] sm:$0xff]
    %v278 = vld [vmem:[#allocation4 + $0x30] sm:$0xff]
    %v279 = vld [vmem:[#allocation4 + $0x38] sm:$0xff]
    %v280 = vld [vmem:[#allocation4 + $0x40] sm:$0xff]
    %v281 = vld [vmem:[#allocation4 + $0x48] sm:$0xff]
    %v282 = vld [vmem:[#allocation4 + $0x50] sm:$0xff]
    %v283 = vld [vmem:[#allocation4 + $0x58] sm:$0xff]
    %v284 = vld [vmem:[#allocation4 + $0x60] sm:$0xff]
    %v285 = vld [vmem:[#allocation4 + $0x68] sm:$0xff]
    %v286 = vld [vmem:[#allocation4 + $0x70] sm:$0xff]
    %v287 = vld [vmem:[#allocation4 + $0x78] sm:$0xff]
    %v288 = vld [vmem:[#allocation4 + $0x80] sm:$0xff]
    %v289 = vld [vmem:[#allocation4 + $0x88] sm:$0xff]
    %v290 = vld [vmem:[#allocation4 + $0x90] sm:$0xff]
    %v291 = vld [vmem:[#allocation4 + $0x98] sm:$0xff]
    %v292 = vld [vmem:[#allocation4 + $0xa0] sm:$0xff]
    %v293 = vld [vmem:[#allocation4 + $0xa8] sm:$0xff]
    %v294 = vld [vmem:[#allocation4 + $0xb0] sm:$0xff]
    %v295 = vld [vmem:[#allocation4 + $0xb8] sm:$0xff]
    %v296 = vld [vmem:[#allocation4 + $0xc0] sm:$0xff]
    %v297 = vld [vmem:[#allocation4 + $0xc8] sm:$0xff]
    %v298 = vld [vmem:[#allocation4 + $0xd0] sm:$0xff]
    %v299 = vld [vmem:[#allocation4 + $0xd8] sm:$0xff]
    %v300 = vld [vmem:[#allocation4 + $0xe0] sm:$0xff]
    %v301 = vld [vmem:[#allocation4 + $0xe8] sm:$0xff]
    %v302 = vld [vmem:[#allocation4 + $0xf0] sm:$0xff]
    %v303 = vld [vmem:[#allocation4 + $0xf8] sm:$0xff]
    %v304 = vld [vmem:[%s4] sm:$0x3]
    %v306 = vlaneseq
    %v307 = vshrl.u32 %v306, 7
    %v308 = vsub.s32 0, %v307
    %v309 = vrot.slane %v304, %v308
    %v310 = vlaneseq
    %v311 = vshrl.u32 %v310, 7
    %v312 = vsub.s32 1, %v311
    %v313 = vrot.slane %v304, %v312
    %v348 = vunpack.c.l.b16 %v272
    %v349 = vunpack.c.h.b16 %v272
    %v350 = vunpack.c.l.b16 %v273
    %v351 = vunpack.c.h.b16 %v273
    %v352 = vunpack.c.l.b16 %v274
    %v353 = vunpack.c.h.b16 %v274
    %v354 = vunpack.c.l.b16 %v275
    %v355 = vunpack.c.h.b16 %v275
    %v356 = vunpack.c.l.b16 %v276
    %v357 = vunpack.c.h.b16 %v276
    %v358 = vunpack.c.l.b16 %v277
    %v359 = vunpack.c.h.b16 %v277
    %v360 = vunpack.c.l.b16 %v278
    %v361 = vunpack.c.h.b16 %v278
    %v362 = vunpack.c.l.b16 %v279
    %v363 = vunpack.c.h.b16 %v279
    %v364 = vunpack.c.l.b16 %v280
    %v365 = vunpack.c.h.b16 %v280
    %v366 = vunpack.c.l.b16 %v281
    %v367 = vunpack.c.h.b16 %v281
    %v368 = vunpack.c.l.b16 %v282
    %v369 = vunpack.c.h.b16 %v282
    %v370 = vunpack.c.l.b16 %v283
    %v371 = vunpack.c.h.b16 %v283
    %v372 = vunpack.c.l.b16 %v284
    %v373 = vunpack.c.h.b16 %v284
    %v374 = vunpack.c.l.b16 %v285
    %v375 = vunpack.c.h.b16 %v285
    %v376 = vunpack.c.l.b16 %v286
    %v377 = vunpack.c.h.b16 %v286
    %v378 = vunpack.c.l.b16 %v287
    %v379 = vunpack.c.h.b16 %v287
    %v380 = vunpack.c.l.b16 %v288
    %v381 = vunpack.c.h.b16 %v288
    %v382 = vunpack.c.l.b16 %v289
    %v383 = vunpack.c.h.b16 %v289
    %v384 = vunpack.c.l.b16 %v290
    %v385 = vunpack.c.h.b16 %v290
    %v386 = vunpack.c.l.b16 %v291
    %v387 = vunpack.c.h.b16 %v291
    %v388 = vunpack.c.l.b16 %v292
    %v389 = vunpack.c.h.b16 %v292
    %v390 = vunpack.c.l.b16 %v293
    %v391 = vunpack.c.h.b16 %v293
    %v392 = vunpack.c.l.b16 %v294
    %v393 = vunpack.c.h.b16 %v294
    %v394 = vunpack.c.l.b16 %v295
    %v395 = vunpack.c.h.b16 %v295
    %v396 = vunpack.c.l.b16 %v296
    %v397 = vunpack.c.h.b16 %v296
    %v398 = vunpack.c.l.b16 %v297
    %v399 = vunpack.c.h.b16 %v297
    %v400 = vunpack.c.l.b16 %v298
    %v401 = vunpack.c.h.b16 %v298
    %v402 = vunpack.c.l.b16 %v299
    %v403 = vunpack.c.h.b16 %v299
    %v404 = vunpack.c.l.b16 %v300
    %v405 = vunpack.c.h.b16 %v300
    %v406 = vunpack.c.l.b16 %v301
    %v407 = vunpack.c.h.b16 %v301
    %v408 = vunpack.c.l.b16 %v302
    %v409 = vunpack.c.h.b16 %v302
    %v410 = vunpack.c.l.b16 %v303
    %v411 = vunpack.c.h.b16 %v303
    %v412 = vpack.c.b16 %v350, %v348
    %v413 = vpack.c.b16 %v351, %v349
    %v414 = vpack.c.b16 %v354, %v352
    %v415 = vpack.c.b16 %v355, %v353
    %v416 = vpack.c.b16 %v358, %v356
    %v417 = vpack.c.b16 %v359, %v357
    %v418 = vpack.c.b16 %v362, %v360
    %v419 = vpack.c.b16 %v363, %v361
    %v420 = vpack.c.b16 %v366, %v364
    %v421 = vpack.c.b16 %v367, %v365
    %v422 = vpack.c.b16 %v370, %v368
    %v423 = vpack.c.b16 %v371, %v369
    %v424 = vpack.c.b16 %v374, %v372
    %v425 = vpack.c.b16 %v375, %v373
    %v426 = vpack.c.b16 %v378, %v376
    %v427 = vpack.c.b16 %v379, %v377
    %v428 = vpack.c.b16 %v382, %v380
    %v429 = vpack.c.b16 %v383, %v381
    %v430 = vpack.c.b16 %v386, %v384
    %v431 = vpack.c.b16 %v387, %v385
    %v432 = vpack.c.b16 %v390, %v388
    %v433 = vpack.c.b16 %v391, %v389
    %v434 = vpack.c.b16 %v394, %v392
    %v435 = vpack.c.b16 %v395, %v393
    %v436 = vpack.c.b16 %v398, %v396
    %v437 = vpack.c.b16 %v399, %v397
    %v438 = vpack.c.b16 %v402, %v400
    %v439 = vpack.c.b16 %v403, %v401
    %v440 = vpack.c.b16 %v406, %v404
    %v441 = vpack.c.b16 %v407, %v405
    %v442 = vpack.c.b16 %v410, %v408
    %v443 = vpack.c.b16 %v411, %v409
    %476 = vmatprep.subr.bf16.mxu0 %v413
    %477 = vmatpush1.bf16.msra.mxu0 %v412
    %478 = vmatprep.subr.bf16.mxu0 %v415
    %479 = vmatpush1.bf16.msra.mxu0 %v414
    %480 = vmatprep.subr.bf16.mxu0 %v417
    %481 = vmatpush1.bf16.msra.mxu0 %v416
    %482 = vmatprep.subr.bf16.mxu0 %v419
    %483 = vmatpush1.bf16.msra.mxu0 %v418
    %484 = vmatprep.subr.bf16.mxu0 %v421
    %485 = vmatpush1.bf16.msra.mxu0 %v420
    %486 = vmatprep.subr.bf16.mxu0 %v423
    %487 = vmatpush1.bf16.msra.mxu0 %v422
    %488 = vmatprep.subr.bf16.mxu0 %v425
    %489 = vmatpush1.bf16.msra.mxu0 %v424
    %490 = vmatprep.subr.bf16.mxu0 %v427
    %491 = vmatpush1.bf16.msra.mxu0 %v426
    %492 = vmatprep.subr.bf16.mxu0 %v429
    %493 = vmatpush1.bf16.msra.mxu0 %v428
    %494 = vmatprep.subr.bf16.mxu0 %v431
    %495 = vmatpush1.bf16.msra.mxu0 %v430
    %496 = vmatprep.subr.bf16.mxu0 %v433
    %497 = vmatpush1.bf16.msra.mxu0 %v432
    %498 = vmatprep.subr.bf16.mxu0 %v435
    %499 = vmatpush1.bf16.msra.mxu0 %v434
    %500 = vmatprep.subr.bf16.mxu0 %v437
    %501 = vmatpush1.bf16.msra.mxu0 %v436
    %502 = vmatprep.subr.bf16.mxu0 %v439
    %503 = vmatpush1.bf16.msra.mxu0 %v438
    %504 = vmatprep.subr.bf16.mxu0 %v441
    %505 = vmatpush1.bf16.msra.mxu0 %v440
    %506 = vmatprep.subr.bf16.mxu0 %v443
    %507 = vmatpush1.bf16.msra.mxu0 %v442
    %508 = vmatprep.mubr.bf16.mxu0 %v271
    %509 = vmatmul.mubr.bf16.gmra.mrb[0].mxu0 %v270
    %v510 = vpop.f32.mrb[0].mxu0
    %v511 = vadd.f32 %v309, %v510
    %v512 = vpop.f32.mrb[0].mxu0
    %v513 = vadd.f32 %v313, %v512
    %v514 = vpop.f32.mrb[0].mxu0
    %v515 = vadd.f32 %v309, %v514
    %v516 = vpop.f32.mrb[0].mxu0
    %v517 = vadd.f32 %v313, %v516
    %518 = vdwg.mxu0
    %v519 = vmax.f32 %v511, 0.0
    %v520 = vmax.f32 %v513, 0.0
    %v521 = vmax.f32 %v515, 0.0
    %v522 = vmax.f32 %v517, 0.0
    %v523 = vpack.c.bf16 %v521, %v519
    %v524 = vpack.c.bf16 %v522, %v520
    %v525 = vld [vmem:[#allocation6] sm:$0xf]
    %v526 = vld [vmem:[#allocation6 + $0x4] sm:$0xf]
    %v527 = vld [vmem:[#allocation6 + $0x8] sm:$0xf]
    %v528 = vld [vmem:[#allocation6 + $0xc] sm:$0xf]
    %v529 = vld [vmem:[#allocation6 + $0x10] sm:$0xf]
    %v530 = vld [vmem:[#allocation6 + $0x14] sm:$0xf]
    %v531 = vld [vmem:[#allocation6 + $0x18] sm:$0xf]
    %v532 = vld [vmem:[#allocation6 + $0x1c] sm:$0xf]
    %v533 = vld [vmem:[#allocation6 + $0x20] sm:$0xf]
    %v534 = vld [vmem:[#allocation6 + $0x24] sm:$0xf]
    %v535 = vld [vmem:[#allocation6 + $0x28] sm:$0xf]
    %v536 = vld [vmem:[#allocation6 + $0x2c] sm:$0xf]
    %v537 = vld [vmem:[#allocation6 + $0x30] sm:$0xf]
    %v538 = vld [vmem:[#allocation6 + $0x34] sm:$0xf]
    %v539 = vld [vmem:[#allocation6 + $0x38] sm:$0xf]
    %v540 = vld [vmem:[#allocation6 + $0x3c] sm:$0xf]
    %v541 = vld [vmem:[#allocation6 + $0x40] sm:$0xf]
    %v542 = vld [vmem:[#allocation6 + $0x44] sm:$0xf]
    %v543 = vld [vmem:[#allocation6 + $0x48] sm:$0xf]
    %v544 = vld [vmem:[#allocation6 + $0x4c] sm:$0xf]
    %v545 = vld [vmem:[#allocation6 + $0x50] sm:$0xf]
    %v546 = vld [vmem:[#allocation6 + $0x54] sm:$0xf]
    %v547 = vld [vmem:[#allocation6 + $0x58] sm:$0xf]
    %v548 = vld [vmem:[#allocation6 + $0x5c] sm:$0xf]
    %v549 = vld [vmem:[#allocation6 + $0x60] sm:$0xf]
    %v550 = vld [vmem:[#allocation6 + $0x64] sm:$0xf]
    %v551 = vld [vmem:[#allocation6 + $0x68] sm:$0xf]
    %v552 = vld [vmem:[#allocation6 + $0x6c] sm:$0xf]
    %v553 = vld [vmem:[#allocation6 + $0x70] sm:$0xf]
    %v554 = vld [vmem:[#allocation6 + $0x74] sm:$0xf]
    %v555 = vld [vmem:[#allocation6 + $0x78] sm:$0xf]
    %v556 = vld [vmem:[#allocation6 + $0x7c] sm:$0xf]
    %v557 = vld [vmem:[%s6] sm:$0x1]
    %v559 = vlaneseq
    %v560 = vshrl.u32 %v559, 7
    %v561 = vsub.s32 0, %v560
    %v562 = vrot.slane %v557, %v561
    %v596 = vunpack.c.l.b16 %v525
    %v597 = vunpack.c.l.b16 %v526
    %v598 = vunpack.c.l.b16 %v527
    %v599 = vunpack.c.l.b16 %v528
    %v600 = vunpack.c.l.b16 %v529
    %v601 = vunpack.c.l.b16 %v530
    %v602 = vunpack.c.l.b16 %v531
    %v603 = vunpack.c.l.b16 %v532
    %v604 = vunpack.c.l.b16 %v533
    %v605 = vunpack.c.l.b16 %v534
    %v606 = vunpack.c.l.b16 %v535
    %v607 = vunpack.c.l.b16 %v536
    %v608 = vunpack.c.l.b16 %v537
    %v609 = vunpack.c.l.b16 %v538
    %v610 = vunpack.c.l.b16 %v539
    %v611 = vunpack.c.l.b16 %v540
    %v612 = vunpack.c.l.b16 %v541
    %v613 = vunpack.c.l.b16 %v542
    %v614 = vunpack.c.l.b16 %v543
    %v615 = vunpack.c.l.b16 %v544
    %v616 = vunpack.c.l.b16 %v545
    %v617 = vunpack.c.l.b16 %v546
    %v618 = vunpack.c.l.b16 %v547
    %v619 = vunpack.c.l.b16 %v548
    %v620 = vunpack.c.l.b16 %v549
    %v621 = vunpack.c.l.b16 %v550
    %v622 = vunpack.c.l.b16 %v551
    %v623 = vunpack.c.l.b16 %v552
    %v624 = vunpack.c.l.b16 %v553
    %v625 = vunpack.c.l.b16 %v554
    %v626 = vunpack.c.l.b16 %v555
    %v627 = vunpack.c.l.b16 %v556
    %v628 = vpack.c.b16 %v597, %v596
    %v629 = vpack.c.b16 %v599, %v598
    %v630 = vpack.c.b16 %v601, %v600
    %v631 = vpack.c.b16 %v603, %v602
    %v632 = vpack.c.b16 %v605, %v604
    %v633 = vpack.c.b16 %v607, %v606
    %v634 = vpack.c.b16 %v609, %v608
    %v635 = vpack.c.b16 %v611, %v610
    %v636 = vpack.c.b16 %v613, %v612
    %v637 = vpack.c.b16 %v615, %v614
    %v638 = vpack.c.b16 %v617, %v616
    %v639 = vpack.c.b16 %v619, %v618
    %v640 = vpack.c.b16 %v621, %v620
    %v641 = vpack.c.b16 %v623, %v622
    %v642 = vpack.c.b16 %v625, %v624
    %v643 = vpack.c.b16 %v627, %v626
    %660 = vmatprep.subr.bf16.mxu0 0
    %661 = vmatpush1.bf16.msra.mxu0 %v628
    %662 = vmatprep.subr.bf16.mxu0 0
    %663 = vmatpush1.bf16.msra.mxu0 %v629
    %664 = vmatprep.subr.bf16.mxu0 0
    %665 = vmatpush1.bf16.msra.mxu0 %v630
    %666 = vmatprep.subr.bf16.mxu0 0
    %667 = vmatpush1.bf16.msra.mxu0 %v631
    %668 = vmatprep.subr.bf16.mxu0 0
    %669 = vmatpush1.bf16.msra.mxu0 %v632
    %670 = vmatprep.subr.bf16.mxu0 0
    %671 = vmatpush1.bf16.msra.mxu0 %v633
    %672 = vmatprep.subr.bf16.mxu0 0
    %673 = vmatpush1.bf16.msra.mxu0 %v634
    %674 = vmatprep.subr.bf16.mxu0 0
    %675 = vmatpush1.bf16.msra.mxu0 %v635
    %676 = vmatprep.subr.bf16.mxu0 0
    %677 = vmatpush1.bf16.msra.mxu0 %v636
    %678 = vmatprep.subr.bf16.mxu0 0
    %679 = vmatpush1.bf16.msra.mxu0 %v637
    %680 = vmatprep.subr.bf16.mxu0 0
    %681 = vmatpush1.bf16.msra.mxu0 %v638
    %682 = vmatprep.subr.bf16.mxu0 0
    %683 = vmatpush1.bf16.msra.mxu0 %v639
    %684 = vmatprep.subr.bf16.mxu0 0
    %685 = vmatpush1.bf16.msra.mxu0 %v640
    %686 = vmatprep.subr.bf16.mxu0 0
    %687 = vmatpush1.bf16.msra.mxu0 %v641
    %688 = vmatprep.subr.bf16.mxu0 0
    %689 = vmatpush1.bf16.msra.mxu0 %v642
    %690 = vmatprep.subr.bf16.mxu0 0
    %691 = vmatpush1.bf16.msra.mxu0 %v643
    %692 = vmatprep.mubr.bf16.mxu0 %v524
    %693 = vmatmul.mubr.bf16.gmra.mrb[0].mxu0 %v523
    %v694 = vpop.f32.mrb[0].mxu0
    %v695 = vadd.f32 %v562, %v694
    %v696 = vpop.f32.mrb[0].mxu0
    %v697 = vpop.f32.mrb[0].mxu0
    %v698 = vadd.f32 %v562, %v697
    %v699 = vpop.f32.mrb[0].mxu0
    %700 = vdwg.mxu0
    %v701 = vmax.f32 %v695, 0.0
    %v702 = vmax.f32 %v698, 0.0
    %v703 = vpack.c.bf16 %v702, %v701
    %v704 = vld [vmem:[#allocation7] sm:$0xf]
    %v705 = vld [vmem:[#allocation7 + $0x4] sm:$0xf]
    %v706 = vld [vmem:[#allocation7 + $0x8] sm:$0xf]
    %v707 = vld [vmem:[#allocation7 + $0xc] sm:$0xf]
    %v708 = vld [vmem:[#allocation7 + $0x10] sm:$0xf]
    %v709 = vld [vmem:[#allocation7 + $0x14] sm:$0xf]
    %v710 = vld [vmem:[#allocation7 + $0x18] sm:$0xf]
    %v711 = vld [vmem:[#allocation7 + $0x1c] sm:$0xf]
    %v712 = vld [vmem:[#allocation7 + $0x20] sm:$0xf]
    %v713 = vld [vmem:[#allocation7 + $0x24] sm:$0xf]
    %v714 = vld [vmem:[#allocation7 + $0x28] sm:$0xf]
    %v715 = vld [vmem:[#allocation7 + $0x2c] sm:$0xf]
    %v716 = vld [vmem:[#allocation7 + $0x30] sm:$0xf]
    %v717 = vld [vmem:[#allocation7 + $0x34] sm:$0xf]
    %v718 = vld [vmem:[#allocation7 + $0x38] sm:$0xf]
    %v719 = vld [vmem:[#allocation7 + $0x3c] sm:$0xf]
    %v720 = vld [vmem:[%s8] sm:$0x1]
    %v722 = vlaneseq
    %v723 = vshrl.u32 %v722, 7
    %v724 = vsub.s32 0, %v723
    %v725 = vrot.slane %v720, %v724
    %v743 = vunpack.c.l.b16 %v704
    %v744 = vunpack.c.l.b16 %v705
    %v745 = vunpack.c.l.b16 %v706
    %v746 = vunpack.c.l.b16 %v707
    %v747 = vunpack.c.l.b16 %v708
    %v748 = vunpack.c.l.b16 %v709
    %v749 = vunpack.c.l.b16 %v710
    %v750 = vunpack.c.l.b16 %v711
    %v751 = vunpack.c.l.b16 %v712
    %v752 = vunpack.c.l.b16 %v713
    %v753 = vunpack.c.l.b16 %v714
    %v754 = vunpack.c.l.b16 %v715
    %v755 = vunpack.c.l.b16 %v716
    %v756 = vunpack.c.l.b16 %v717
    %v757 = vunpack.c.l.b16 %v718
    %v758 = vunpack.c.l.b16 %v719
    %v759 = vpack.c.b16 %v744, %v743
    %v760 = vpack.c.b16 %v746, %v745
    %v761 = vpack.c.b16 %v748, %v747
    %v762 = vpack.c.b16 %v750, %v749
    %v763 = vpack.c.b16 %v752, %v751
    %v764 = vpack.c.b16 %v754, %v753
    %v765 = vpack.c.b16 %v756, %v755
    %v766 = vpack.c.b16 %v758, %v757
    %775 = vmatprep.subr.bf16.mxu0 0
    %776 = vmatpush1.bf16.msra.mxu0 %v759
    %777 = vmatprep.subr.bf16.mxu0 0
    %778 = vmatpush1.bf16.msra.mxu0 %v760
    %779 = vmatprep.subr.bf16.mxu0 0
    %780 = vmatpush1.bf16.msra.mxu0 %v761
    %781 = vmatprep.subr.bf16.mxu0 0
    %782 = vmatpush1.bf16.msra.mxu0 %v762
    %783 = vmatprep.subr.bf16.mxu0 0
    %784 = vmatpush1.bf16.msra.mxu0 %v763
    %785 = vmatprep.subr.bf16.mxu0 0
    %786 = vmatpush1.bf16.msra.mxu0 %v764
    %787 = vmatprep.subr.bf16.mxu0 0
    %788 = vmatpush1.bf16.msra.mxu0 %v765
    %789 = vmatprep.subr.bf16.mxu0 0
    %790 = vmatpush1.bf16.msra.mxu0 %v766
    %791 = vmatprep.subr.bf16.mxu0 0
    %792 = vmatpush1.bf16.msra.mxu0 0
    %793 = vmatprep.subr.bf16.mxu0 0
    %794 = vmatpush1.bf16.msra.mxu0 0
    %795 = vmatprep.subr.bf16.mxu0 0
    %796 = vmatpush1.bf16.msra.mxu0 0
    %797 = vmatprep.subr.bf16.mxu0 0
    %798 = vmatpush1.bf16.msra.mxu0 0
    %799 = vmatprep.subr.bf16.mxu0 0
    %800 = vmatpush1.bf16.msra.mxu0 0
    %801 = vmatprep.subr.bf16.mxu0 0
    %802 = vmatpush1.bf16.msra.mxu0 0
    %803 = vmatprep.subr.bf16.mxu0 0
    %804 = vmatpush1.bf16.msra.mxu0 0
    %805 = vmatprep.subr.bf16.mxu0 0
    %806 = vmatpush1.bf16.msra.mxu0 0
    %807 = vmatprep.mubr.bf16.mxu0 0
    %808 = vmatmul.mubr.bf16.gmra.mrb[0].mxu0 %v703
    %v809 = vpop.f32.mrb[0].mxu0
    %v810 = vadd.f32 %v725, %v809
    %v811 = vpop.f32.mrb[0].mxu0
    %v812 = vpop.f32.mrb[0].mxu0
    %v813 = vadd.f32 %v725, %v812
    %v814 = vpop.f32.mrb[0].mxu0
    %815 = vdwg.mxu0
    %v816 = vmax.f32 %v810, 0.0
    %v817 = vmax.f32 %v813, 0.0
    %v818 = vpack.c.bf16 %v817, %v816
    %v819 = vld [vmem:[#allocation9] sm:$0xf]
    %v820 = vld [vmem:[#allocation9 + $0x4] sm:$0xf]
    %v821 = vld [vmem:[#allocation9 + $0x8] sm:$0xf]
    %v822 = vld [vmem:[#allocation9 + $0xc] sm:$0xf]
    %v823 = vld [vmem:[#allocation9 + $0x10] sm:$0xf]
    %v824 = vld [vmem:[#allocation9 + $0x14] sm:$0xf]
    %v825 = vld [vmem:[#allocation9 + $0x18] sm:$0xf]
    %v826 = vld [vmem:[#allocation9 + $0x1c] sm:$0xf]
    %v827 = vld [vmem:[#allocation9 + $0x20] sm:$0xf]
    %v828 = vld [vmem:[#allocation9 + $0x24] sm:$0xf]
    %v829 = vld [vmem:[#allocation9 + $0x28] sm:$0xf]
    %v830 = vld [vmem:[#allocation9 + $0x2c] sm:$0xf]
    %v831 = vld [vmem:[#allocation9 + $0x30] sm:$0xf]
    %v832 = vld [vmem:[#allocation9 + $0x34] sm:$0xf]
    %v833 = vld [vmem:[#allocation9 + $0x38] sm:$0xf]
    %v834 = vld [vmem:[#allocation9 + $0x3c] sm:$0xf]
    %v835 = vld [vmem:[%s10] sm:$0x1]
    %v837 = vlaneseq
    %v838 = vshrl.u32 %v837, 7
    %v839 = vsub.s32 0, %v838
    %v840 = vrot.slane %v835, %v839
    %v858 = vunpack.c.l.b16 %v819
    %v859 = vunpack.c.l.b16 %v820
    %v860 = vunpack.c.l.b16 %v821
    %v861 = vunpack.c.l.b16 %v822
    %v862 = vunpack.c.l.b16 %v823
    %v863 = vunpack.c.l.b16 %v824
    %v864 = vunpack.c.l.b16 %v825
    %v865 = vunpack.c.l.b16 %v826
    %v866 = vunpack.c.l.b16 %v827
    %v867 = vunpack.c.l.b16 %v828
    %v868 = vunpack.c.l.b16 %v829
    %v869 = vunpack.c.l.b16 %v830
    %v870 = vunpack.c.l.b16 %v831
    %v871 = vunpack.c.l.b16 %v832
    %v872 = vunpack.c.l.b16 %v833
    %v873 = vunpack.c.l.b16 %v834
    %v874 = vpack.c.b16 %v859, %v858
    %v875 = vpack.c.b16 %v861, %v860
    %v876 = vpack.c.b16 %v863, %v862
    %v877 = vpack.c.b16 %v865, %v864
    %v878 = vpack.c.b16 %v867, %v866
    %v879 = vpack.c.b16 %v869, %v868
    %v880 = vpack.c.b16 %v871, %v870
    %v881 = vpack.c.b16 %v873, %v872
    %890 = vmatprep.subr.bf16.mxu0 0
    %891 = vmatpush1.bf16.msra.mxu0 %v874
    %892 = vmatprep.subr.bf16.mxu0 0
    %893 = vmatpush1.bf16.msra.mxu0 %v875
    %894 = vmatprep.subr.bf16.mxu0 0
    %895 = vmatpush1.bf16.msra.mxu0 %v876
    %896 = vmatprep.subr.bf16.mxu0 0
    %897 = vmatpush1.bf16.msra.mxu0 %v877
    %898 = vmatprep.subr.bf16.mxu0 0
    %899 = vmatpush1.bf16.msra.mxu0 %v878
    %900 = vmatprep.subr.bf16.mxu0 0
    %901 = vmatpush1.bf16.msra.mxu0 %v879
    %902 = vmatprep.subr.bf16.mxu0 0
    %903 = vmatpush1.bf16.msra.mxu0 %v880
    %904 = vmatprep.subr.bf16.mxu0 0
    %905 = vmatpush1.bf16.msra.mxu0 %v881
    %906 = vmatprep.subr.bf16.mxu0 0
    %907 = vmatpush1.bf16.msra.mxu0 0
    %908 = vmatprep.subr.bf16.mxu0 0
    %909 = vmatpush1.bf16.msra.mxu0 0
    %910 = vmatprep.subr.bf16.mxu0 0
    %911 = vmatpush1.bf16.msra.mxu0 0
    %912 = vmatprep.subr.bf16.mxu0 0
    %913 = vmatpush1.bf16.msra.mxu0 0
    %914 = vmatprep.subr.bf16.mxu0 0
    %915 = vmatpush1.bf16.msra.mxu0 0
    %916 = vmatprep.subr.bf16.mxu0 0
    %917 = vmatpush1.bf16.msra.mxu0 0
    %918 = vmatprep.subr.bf16.mxu0 0
    %919 = vmatpush1.bf16.msra.mxu0 0
    %920 = vmatprep.subr.bf16.mxu0 0
    %921 = vmatpush1.bf16.msra.mxu0 0
    %922 = vmatprep.mubr.bf16.mxu0 0
    %923 = vmatmul.mubr.bf16.gmra.mrb[0].mxu0 %v818
    %v924 = vpop.f32.mrb[0].mxu0
    %v925 = vadd.f32 %v840, %v924
    %v926 = vpop.f32.mrb[0].mxu0
    %v927 = vpop.f32.mrb[0].mxu0
    %v928 = vadd.f32 %v840, %v927
    %v929 = vpop.f32.mrb[0].mxu0
    %930 = vdwg.mxu0
    %v931 = vpack.c.bf16 %v928, %v925
    %v933 = vunpack.c.l.b16 %v931
    %v934 = vunpack.c.h.b16 %v931
    %v935 = vpack.c.b16 %v933, %v933
    %v936 = vpack.c.b16 %v934, %v934
    %939 = vst [vmem:[%s11] sm:$0xf] %v935
    %940 = vst [vmem:[%s11 + $0x4] sm:$0xf] %v936
    // Predicated region
    $region66: #{mlp_v2_forward.1} parent=1 // pred_check
      _
    $region67: #{mlp_v2_forward.1} parent=1 // pred_check_branch
      %942 = sbr.rel (0) target = $region69
    $region68: #{mlp_v2_forward.1} parent=1 // pred_region
      _
    $region69: #{mlp_v2_forward.1} parent=1 // pred_fallthru
      _
    // Predicated region
    $region70: #{mlp_v2_forward.1} parent=1 // pred_check
      _
    $region71: #{mlp_v2_forward.1} parent=1 // pred_check_branch
      %944 = sbr.rel (0) target = $region73
    $region72: #{mlp_v2_forward.1} parent=1 // pred_region
      _
    $region73: #{mlp_v2_forward.1} parent=1 // pred_fallthru
      _
    %945 = vsyncpa [#allocation3], 1
    %946 = vsyncpa [#allocation5], 1
    %947 = vsyncpa [#allocation8], 1

</llo_original>
